<compile_context>
chip_gen: v7x
topology: tpu7x:2x2x1
jax: 0.10.0
libtpu: 0.0.40
codegen_flags: <defaults>
</compile_context>

<pallas_src>
from math import sqrt
import functools

import jax
import jax.numpy as jnp
from jax import lax
from jax.experimental import pallas as pl
from jax.experimental.pallas import tpu as pltpu

LANE = 128


def _ceil_to(v, m):
    return -(-v // m) * m


def _mhsa_kernel(x_ref, wqkv_ref, bqkv_ref, wo_ref, bo_ref, out_ref,
                 q_scr, k_scr, v_scr, *, num_heads, dk, d_pad, tq, row_chunk):
    """Grid = (batch, query_tiles).

    x_ref    : (1, N, Din)      bf16   full sequence for this batch element
    wqkv_ref : (Din, 3*Dp)      bf16   fused [Wq*scale | Wk | Wv], lane-padded
    bqkv_ref : (1, 3*Dp)        f32
    wo_ref   : (Dm, Dp)         bf16   output projection (lane-padded cols)
    bo_ref   : (1, Dp)          f32
    out_ref  : (1, TQ, Dp)      f32
    q/k/v_scr: (N, Dp)          bf16   whole-sequence projections, resident in
                                       VMEM scratch across the query-tile axis.
    """
    qi = pl.program_id(1)
    n = q_scr.shape[0]

    # Compute Q/K/V once per batch element (query-tile axis is the inner,
    # sequential grid axis).  Chunked over rows so only a (row_chunk, 3*Dp)
    # f32 temporary is live at any time.
    @pl.when(qi == 0)
    def _compute_qkv():
        @pl.loop(0, n // row_chunk)
        def _(c):
            r0 = pl.multiple_of(c * row_chunk, row_chunk)
            xb = x_ref[0, pl.ds(r0, row_chunk), :]                 # (RC, Din) bf16
            qkv = jnp.dot(xb, wqkv_ref[...],
                          preferred_element_type=jnp.float32) + bqkv_ref[...]
            qkv = qkv.astype(jnp.bfloat16)                         # (RC, 3*Dp)
            q_scr[pl.ds(r0, row_chunk), :] = qkv[:, :d_pad]
            k_scr[pl.ds(r0, row_chunk), :] = qkv[:, d_pad:2 * d_pad]
            v_scr[pl.ds(r0, row_chunk), :] = qkv[:, 2 * d_pad:]

    q_start = pl.multiple_of(qi * tq, tq)

    # Per-head attention with deferred softmax normalization; each head's
    # (TQ, dk) result is collected and the output projection is done once.
    head_outs = []
    for h in range(num_heads):                                     # static, small
        sl = slice(h * dk, (h + 1) * dk)
        qh = q_scr[pl.ds(q_start, tq), sl]                         # (TQ, dk) bf16
        kh = k_scr[:, sl]                                          # (N, dk)  bf16
        vh = v_scr[:, sl]                                          # (N, dk)  bf16

        # Scores: contract last dim of both operands (no explicit K^T).
        s = lax.dot_general(qh, kh, (((1,), (1,)), ((), ())),
                            preferred_element_type=jnp.float32)    # (TQ, N) f32
        m = jnp.max(s, axis=-1, keepdims=True)
        p = jnp.exp(s - m)                                         # un-normalized
        r = pl.reciprocal(jnp.sum(p, axis=-1, keepdims=True), approx=True)
        ah = jnp.dot(p.astype(jnp.bfloat16), vh,
                     preferred_element_type=jnp.float32)           # (TQ, dk) f32
        head_outs.append(ah * r)                                   # normalize small

    att = jnp.concatenate(head_outs, axis=-1).astype(jnp.bfloat16)  # (TQ, Dm)
    out = jnp.dot(att, wo_ref[...],
                  preferred_element_type=jnp.float32) + bo_ref[...]  # (TQ, Dp)
    out_ref[0] = out.astype(out_ref.dtype)


def multi_head_self_attention(x, params, num_heads, *, tq=None):
    """x: (B, N, Din) float32; params: dict of f32 weights (W stored (in, out))."""
    B, N, Din = x.shape
    Dm = params["wq"].shape[1]
    assert Dm % num_heads == 0, "d_model must be a multiple of num_heads"
    dk = Dm // num_heads
    scale = 1.0 / sqrt(dk)

    # Lane-pad each projection chunk to a 128-multiple; fold scale into Q.
    D_pad = _ceil_to(Dm, LANE)

    def pad_cols(w):
        return jnp.pad(w, ((0, 0), (0, D_pad - w.shape[1])))

    wqkv = jnp.concatenate([pad_cols(params["wq"] * scale),
                            pad_cols(params["wk"]),
                            pad_cols(params["wv"])], axis=1)       # (Din, 3*Dp)
    bqkv = jnp.concatenate([pad_cols(params["bq"] * scale),
                            pad_cols(params["bk"]),
                            pad_cols(params["bv"])], axis=1)       # (1, 3*Dp)
    wo = pad_cols(params["wo"])                                     # (Dm, Dp)
    bo = pad_cols(params["bo"])                                     # (1, Dp)

    # bf16 operands for the MXU (f32 accumulation inside the kernel).
    x_bf = x.astype(jnp.bfloat16)
    wqkv_bf = wqkv.astype(jnp.bfloat16)
    wo_bf = wo.astype(jnp.bfloat16)

    # Query-tile size: full sequence when small, otherwise 128/256-row tiles.
    if tq is None:
        if N <= 128:
            tq = N
        elif N % 256 == 0:
            tq = 256
        else:
            tq = 128
    assert N % tq == 0 and (tq == N or tq % 8 == 0)
    n_q_tiles = N // tq

    # Row-chunking of the tile-0 fused QKV projection.
    if N % 256 == 0:
        row_chunk = 256
    elif N % 128 == 0:
        row_chunk = 128
    else:
        row_chunk = N

    # Scoped-VMEM budget sized to actual usage (scratch + blocks + temps),
    # with headroom; clamped so it is safe on v5e/v6e/v7x.
    vmem_est = (
        3 * N * D_pad * 2                               # q/k/v scratch (bf16)
        + 2 * _ceil_to(N, 8) * _ceil_to(Din, LANE) * 2  # x block (double-buf)
        + 2 * _ceil_to(Din, 8) * 3 * D_pad * 2          # wqkv
        + 2 * 8 * 3 * D_pad * 4                         # bqkv
        + 2 * _ceil_to(Dm, 8) * D_pad * 2               # wo
        + 2 * 8 * D_pad * 4                             # bo
        + 2 * tq * D_pad * 4                            # output blocks
        + 6 * tq * _ceil_to(N, LANE) * 4                # score/exp temporaries
        + row_chunk * 3 * D_pad * 4                     # f32 qkv chunk temp
    )
    vmem_limit = int(min(max(2 * vmem_est, 32 * 2**20), 60 * 2**20))

    kernel = functools.partial(_mhsa_kernel, num_heads=num_heads, dk=dk,
                               d_pad=D_pad, tq=tq, row_chunk=row_chunk)

    out = pl.pallas_call(
        kernel,
        out_shape=jax.ShapeDtypeStruct((B, N, D_pad), x.dtype),
        grid_spec=pltpu.PrefetchScalarGridSpec(
            num_scalar_prefetch=0,
            grid=(B, n_q_tiles),
            in_specs=[
                pl.BlockSpec((1, N, Din), lambda b, q: (b, 0, 0)),     # x
                pl.BlockSpec((Din, 3 * D_pad), lambda b, q: (0, 0)),   # Wqkv
                pl.BlockSpec((1, 3 * D_pad), lambda b, q: (0, 0)),     # bqkv
                pl.BlockSpec((Dm, D_pad), lambda b, q: (0, 0)),        # Wo
                pl.BlockSpec((1, D_pad), lambda b, q: (0, 0)),         # bo
            ],
            out_specs=pl.BlockSpec((1, tq, D_pad), lambda b, q: (b, q, 0)),
            scratch_shapes=[
                pltpu.VMEM((N, D_pad), jnp.bfloat16),   # Q (whole sequence)
                pltpu.VMEM((N, D_pad), jnp.bfloat16),   # K
                pltpu.VMEM((N, D_pad), jnp.bfloat16),   # V
            ],
        ),
        compiler_params=pltpu.CompilerParams(
            # batch is megacore-parallel; query tiles are sequential so the
            # VMEM-resident Q/K/V computed at tile 0 can be reused.
            dimension_semantics=("parallel", "arbitrary"),
            vmem_limit_bytes=vmem_limit),
    )(x_bf, wqkv_bf, bqkv, wo_bf, bo)

    return out[:, :, :Dm]


def _init_linear(key, fan_in, fan_out):
    """nn.Linear-style init: U(-1/sqrt(fan_in), 1/sqrt(fan_in)).
    Weight returned already transposed to (fan_in, fan_out)."""
    kw, kb = jax.random.split(key)
    bound = 1.0 / sqrt(fan_in)
    w = jax.random.uniform(kw, (fan_in, fan_out), jnp.float32, -bound, bound)
    b = jax.random.uniform(kb, (1, fan_out), jnp.float32, -bound, bound)
    return w, b


def _reference(x, params, num_heads):
    """Pure-JAX f32 reference mirroring the PyTorch forward."""
    B, N, Din = x.shape
    Dm = params["wq"].shape[1]
    dk = Dm // num_heads
    scale = 1.0 / sqrt(dk)

    q = x @ params["wq"] + params["bq"][0]
    k = x @ params["wk"] + params["bk"][0]
    v = x @ params["wv"] + params["bv"][0]

    def split(t):  # (B, N, Dm) -> (B, nh, N, dk)
        return t.reshape(B, N, num_heads, dk).transpose(0, 2, 1, 3)

    q, k, v = split(q), split(k), split(v)
    dist = jnp.einsum("bhnd,bhmd->bhnm", q, k) * scale
    dist = jax.nn.softmax(dist, axis=-1)
    att = jnp.einsum("bhnm,bhmd->bhnd", dist, v)
    att = att.transpose(0, 2, 1, 3).reshape(B, N, Dm)
    return att @ params["wo"] + params["bo"][0]


if __name__ == "__main__":
    # Small shapes consistent with the module: dim_in=4, d_model=12, heads=3.
    batch, seq, dim_in = 2, 8, 4
    d_model, num_heads = 12, 3

    key = jax.random.PRNGKey(0)
    kx, kq, kk, kv, ko = jax.random.split(key, 5)

    x = jax.random.uniform(kx, (batch, seq, dim_in), jnp.float32)

    wq, bq = _init_linear(kq, dim_in, d_model)
    wk, bk = _init_linear(kk, dim_in, d_model)
    wv, bv = _init_linear(kv, dim_in, d_model)
    wo, bo = _init_linear(ko, d_model, d_model)
    params = dict(wq=wq, bq=bq, wk=wk, bk=bk, wv=wv, bv=bv, wo=wo, bo=bo)

    out = multi_head_self_attention(x, params, num_heads)
    out = jax.block_until_ready(out)

    ref = _reference(x, params, num_heads)
    assert out.shape == (batch, seq, d_model)
    # bf16 MXU operands (vs. the f32 reference) need a relaxed tolerance.
    assert jnp.allclose(out, ref, atol=5e-2, rtol=5e-2), "mismatch vs reference"

    print("KERNEL_OK")
</pallas_src>

<mosaic_0001>
module attributes {stable_mosaic.version = 11 : i64} {
  func.func @_mhsa_kernel(%arg0: i32, %arg1: i32, %arg2: memref<1x8x4xbf16, #tpu.memory_space<vmem>>, %arg3: memref<4x384xbf16, #tpu.memory_space<vmem>>, %arg4: memref<1x384xf32, #tpu.memory_space<vmem>>, %arg5: memref<12x128xbf16, #tpu.memory_space<vmem>>, %arg6: memref<1x128xf32, #tpu.memory_space<vmem>>, %arg7: memref<1x8x128xf32, #tpu.memory_space<vmem>>, %arg8: memref<8x128xbf16, #tpu.memory_space<vmem>>, %arg9: memref<8x128xbf16, #tpu.memory_space<vmem>>, %arg10: memref<8x128xbf16, #tpu.memory_space<vmem>>) attributes {dimension_semantics = [#tpu.dimension_semantics<parallel>, #tpu.dimension_semantics<arbitrary>], iteration_bounds = array<i64: 2, 1>, scalar_prefetch = 0 : i64, scratch_operands = 3 : i64, tpu.core_type = #tpu.core_type<tc>, window_params = [{transform_indices = @transform_0, window_bounds = array<i64: 1, 8, 4>}, {pipeline_mode = #tpu.pipeline_mode<synchronous>, transform_indices = @transform_1, window_bounds = array<i64: 4, 384>}, {pipeline_mode = #tpu.pipeline_mode<synchronous>, transform_indices = @transform_2, window_bounds = array<i64: 1, 384>}, {pipeline_mode = #tpu.pipeline_mode<synchronous>, transform_indices = @transform_3, window_bounds = array<i64: 12, 128>}, {pipeline_mode = #tpu.pipeline_mode<synchronous>, transform_indices = @transform_4, window_bounds = array<i64: 1, 128>}, {transform_indices = @transform_5, window_bounds = array<i64: 1, 8, 128>}]} {
    %c0_i32 = arith.constant 0 : i32
    %0 = arith.cmpi eq, %arg1, %c0_i32 : i32
    %1 = arith.extui %0 : i1 to i32
    %c0_i32_0 = arith.constant 0 : i32
    %2 = arith.cmpi ne, %1, %c0_i32_0 : i32
    scf.if %2 {
      %c0_i32_32 = arith.constant 0 : i32
      %c1_i32 = arith.constant 1 : i32
      %66 = arith.muli %c0_i32_32, %c1_i32 : i32
      %c0_i32_33 = arith.constant 0 : i32
      %67 = arith.addi %c0_i32_33, %66 : i32
      %c8_i32_34 = arith.constant 8 : i32
      %68 = arith.muli %67, %c8_i32_34 : i32
      %69 = tpu.assume_multiple %68, 8 : i32
      %c0_35 = arith.constant 0 : index
      %70 = arith.index_cast %69 : i32 to index
      %c0_36 = arith.constant 0 : index
      %71 = vector.load %arg2[%c0_35, %70, %c0_36] : memref<1x8x4xbf16, #tpu.memory_space<vmem>>, vector<1x8x4xbf16>
      %72 = vector.shape_cast %71 : vector<1x8x4xbf16> to vector<8x4xbf16>
      %c0_37 = arith.constant 0 : index
      %c0_38 = arith.constant 0 : index
      %73 = vector.load %arg3[%c0_37, %c0_38] : memref<4x384xbf16, #tpu.memory_space<vmem>>, vector<4x384xbf16>
      %cst_39 = arith.constant dense<0.000000e+00> : vector<8x384xf32>
      %74 = tpu.matmul %72, %73, %cst_39 {dimension_numbers = #tpu.dot_dimension_numbers<[1], [0], [0], [1], [0, 0, 1, 1], [], []>} : vector<8x4xbf16>, vector<4x384xbf16>, vector<8x384xf32> -> vector<8x384xf32>
      %c0_40 = arith.constant 0 : index
      %c0_41 = arith.constant 0 : index
      %75 = vector.load %arg4[%c0_40, %c0_41] : memref<1x384xf32, #tpu.memory_space<vmem>>, vector<1x384xf32>
      %76 = vector.broadcast %75 : vector<1x384xf32> to vector<8x384xf32>
      %77 = arith.addf %74, %76 : vector<8x384xf32>
      %78 = arith.truncf %77 : vector<8x384xf32> to vector<8x384xbf16>
      %79 = vector.extract_strided_slice %78 {offsets = [0, 0], sizes = [8, 128], strides = [1, 1]} : vector<8x384xbf16> to vector<8x128xbf16>
      %80 = arith.index_cast %69 : i32 to index
      %c0_42 = arith.constant 0 : index
      %81 = vector.load %arg8[%80, %c0_42] : memref<8x128xbf16, #tpu.memory_space<vmem>>, vector<8x128xbf16>
      tpu.vector_store %arg8[%80, %c0_42], %79 {strides = array<i32>} : memref<8x128xbf16, #tpu.memory_space<vmem>>, vector<8x128xbf16>,
      %82 = vector.extract_strided_slice %78 {offsets = [0, 128], sizes = [8, 128], strides = [1, 1]} : vector<8x384xbf16> to vector<8x128xbf16>
      %83 = arith.index_cast %69 : i32 to index
      %c0_43 = arith.constant 0 : index
      %84 = vector.load %arg9[%83, %c0_43] : memref<8x128xbf16, #tpu.memory_space<vmem>>, vector<8x128xbf16>
      tpu.vector_store %arg9[%83, %c0_43], %82 {strides = array<i32>} : memref<8x128xbf16, #tpu.memory_space<vmem>>, vector<8x128xbf16>,
      %85 = vector.extract_strided_slice %78 {offsets = [0, 256], sizes = [8, 128], strides = [1, 1]} : vector<8x384xbf16> to vector<8x128xbf16>
      %86 = arith.index_cast %69 : i32 to index
      %c0_44 = arith.constant 0 : index
      %87 = vector.load %arg10[%86, %c0_44] : memref<8x128xbf16, #tpu.memory_space<vmem>>, vector<8x128xbf16>
      tpu.vector_store %arg10[%86, %c0_44], %85 {strides = array<i32>} : memref<8x128xbf16, #tpu.memory_space<vmem>>, vector<8x128xbf16>,
      %c1_i32_45 = arith.constant 1 : i32
    } else {
    }
    %c8_i32 = arith.constant 8 : i32
    %3 = arith.muli %arg1, %c8_i32 : i32
    %4 = tpu.assume_multiple %3, 8 : i32
    %5 = arith.index_cast %4 : i32 to index
    %c0 = arith.constant 0 : index
    %6 = vector.load %arg8[%5, %c0] : memref<8x128xbf16, #tpu.memory_space<vmem>>, vector<8x4xbf16>
    %c0_1 = arith.constant 0 : index
    %c0_2 = arith.constant 0 : index
    %7 = vector.load %arg9[%c0_1, %c0_2] : memref<8x128xbf16, #tpu.memory_space<vmem>>, vector<8x4xbf16>
    %c0_3 = arith.constant 0 : index
    %c0_4 = arith.constant 0 : index
    %8 = vector.load %arg10[%c0_3, %c0_4] : memref<8x128xbf16, #tpu.memory_space<vmem>>, vector<8x4xbf16>
    %cst = arith.constant dense<0.000000e+00> : vector<8x8xf32>
    %9 = tpu.matmul %6, %7, %cst {dimension_numbers = #tpu.dot_dimension_numbers<[1], [1], [0], [0], [0, 0, 1, 0], [], []>} : vector<8x4xbf16>, vector<8x4xbf16>, vector<8x8xf32> -> vector<8x8xf32>
    %cst_5 = arith.constant dense<0xFF800000> : vector<8xf32>
    %10 = vector.multi_reduction <maximumf>, %9, %cst_5 [1] : vector<8x8xf32> to vector<8xf32>
    %11 = vector.shape_cast %10 : vector<8xf32> to vector<8x1xf32>
    %12 = vector.broadcast %11 : vector<8x1xf32> to vector<8x8xf32>
    %13 = arith.subf %9, %12 : vector<8x8xf32>
    %14 = math.exp %13 : vector<8x8xf32>
    %cst_6 = arith.constant dense<0.000000e+00> : vector<8xf32>
    %15 = vector.multi_reduction <add>, %14, %cst_6 [1] : vector<8x8xf32> to vector<8xf32>
    %16 = vector.shape_cast %15 : vector<8xf32> to vector<8x1xf32>
    %17 = tpu.reciprocal %16 {approx = true} : vector<8x1xf32> -> vector<8x1xf32>
    %18 = arith.truncf %14 : vector<8x8xf32> to vector<8x8xbf16>
    %cst_7 = arith.constant dense<0.000000e+00> : vector<8x4xf32>
    %19 = tpu.matmul %18, %8, %cst_7 {dimension_numbers = #tpu.dot_dimension_numbers<[1], [0], [0], [1], [0, 0, 1, 1], [], []>} : vector<8x8xbf16>, vector<8x4xbf16>, vector<8x4xf32> -> vector<8x4xf32>
    %20 = vector.broadcast %17 : vector<8x1xf32> to vector<8x4xf32>
    %21 = arith.mulf %19, %20 : vector<8x4xf32>
    %22 = arith.index_cast %4 : i32 to index
    %c4 = arith.constant 4 : index
    %23 = vector.load %arg8[%22, %c4] : memref<8x128xbf16, #tpu.memory_space<vmem>>, vector<8x4xbf16>
    %c0_8 = arith.constant 0 : index
    %c4_9 = arith.constant 4 : index
    %24 = vector.load %arg9[%c0_8, %c4_9] : memref<8x128xbf16, #tpu.memory_space<vmem>>, vector<8x4xbf16>
    %c0_10 = arith.constant 0 : index
    %c4_11 = arith.constant 4 : index
    %25 = vector.load %arg10[%c0_10, %c4_11] : memref<8x128xbf16, #tpu.memory_space<vmem>>, vector<8x4xbf16>
    %cst_12 = arith.constant dense<0.000000e+00> : vector<8x8xf32>
    %26 = tpu.matmul %23, %24, %cst_12 {dimension_numbers = #tpu.dot_dimension_numbers<[1], [1], [0], [0], [0, 0, 1, 0], [], []>} : vector<8x4xbf16>, vector<8x4xbf16>, vector<8x8xf32> -> vector<8x8xf32>
    %cst_13 = arith.constant dense<0xFF800000> : vector<8xf32>
    %27 = vector.multi_reduction <maximumf>, %26, %cst_13 [1] : vector<8x8xf32> to vector<8xf32>
    %28 = vector.shape_cast %27 : vector<8xf32> to vector<8x1xf32>
    %29 = vector.broadcast %28 : vector<8x1xf32> to vector<8x8xf32>
    %30 = arith.subf %26, %29 : vector<8x8xf32>
    %31 = math.exp %30 : vector<8x8xf32>
    %cst_14 = arith.constant dense<0.000000e+00> : vector<8xf32>
    %32 = vector.multi_reduction <add>, %31, %cst_14 [1] : vector<8x8xf32> to vector<8xf32>
    %33 = vector.shape_cast %32 : vector<8xf32> to vector<8x1xf32>
    %34 = tpu.reciprocal %33 {approx = true} : vector<8x1xf32> -> vector<8x1xf32>
    %35 = arith.truncf %31 : vector<8x8xf32> to vector<8x8xbf16>
    %cst_15 = arith.constant dense<0.000000e+00> : vector<8x4xf32>
    %36 = tpu.matmul %35, %25, %cst_15 {dimension_numbers = #tpu.dot_dimension_numbers<[1], [0], [0], [1], [0, 0, 1, 1], [], []>} : vector<8x8xbf16>, vector<8x4xbf16>, vector<8x4xf32> -> vector<8x4xf32>
    %37 = vector.broadcast %34 : vector<8x1xf32> to vector<8x4xf32>
    %38 = arith.mulf %36, %37 : vector<8x4xf32>
    %39 = arith.index_cast %4 : i32 to index
    %c8 = arith.constant 8 : index
    %40 = vector.load %arg8[%39, %c8] : memref<8x128xbf16, #tpu.memory_space<vmem>>, vector<8x4xbf16>
    %c0_16 = arith.constant 0 : index
    %c8_17 = arith.constant 8 : index
    %41 = vector.load %arg9[%c0_16, %c8_17] : memref<8x128xbf16, #tpu.memory_space<vmem>>, vector<8x4xbf16>
    %c0_18 = arith.constant 0 : index
    %c8_19 = arith.constant 8 : index
    %42 = vector.load %arg10[%c0_18, %c8_19] : memref<8x128xbf16, #tpu.memory_space<vmem>>, vector<8x4xbf16>
    %cst_20 = arith.constant dense<0.000000e+00> : vector<8x8xf32>
    %43 = tpu.matmul %40, %41, %cst_20 {dimension_numbers = #tpu.dot_dimension_numbers<[1], [1], [0], [0], [0, 0, 1, 0], [], []>} : vector<8x4xbf16>, vector<8x4xbf16>, vector<8x8xf32> -> vector<8x8xf32>
    %cst_21 = arith.constant dense<0xFF800000> : vector<8xf32>
    %44 = vector.multi_reduction <maximumf>, %43, %cst_21 [1] : vector<8x8xf32> to vector<8xf32>
    %45 = vector.shape_cast %44 : vector<8xf32> to vector<8x1xf32>
    %46 = vector.broadcast %45 : vector<8x1xf32> to vector<8x8xf32>
    %47 = arith.subf %43, %46 : vector<8x8xf32>
    %48 = math.exp %47 : vector<8x8xf32>
    %cst_22 = arith.constant dense<0.000000e+00> : vector<8xf32>
    %49 = vector.multi_reduction <add>, %48, %cst_22 [1] : vector<8x8xf32> to vector<8xf32>
    %50 = vector.shape_cast %49 : vector<8xf32> to vector<8x1xf32>
    %51 = tpu.reciprocal %50 {approx = true} : vector<8x1xf32> -> vector<8x1xf32>
    %52 = arith.truncf %48 : vector<8x8xf32> to vector<8x8xbf16>
    %cst_23 = arith.constant dense<0.000000e+00> : vector<8x4xf32>
    %53 = tpu.matmul %52, %42, %cst_23 {dimension_numbers = #tpu.dot_dimension_numbers<[1], [0], [0], [1], [0, 0, 1, 1], [], []>} : vector<8x8xbf16>, vector<8x4xbf16>, vector<8x4xf32> -> vector<8x4xf32>
    %54 = vector.broadcast %51 : vector<8x1xf32> to vector<8x4xf32>
    %55 = arith.mulf %53, %54 : vector<8x4xf32>
    %56 = tpu.concatenate %21, %38, %55 in 1 : vector<8x4xf32>, vector<8x4xf32>, vector<8x4xf32> -> vector<8x12xf32>
    %57 = arith.truncf %56 : vector<8x12xf32> to vector<8x12xbf16>
    %c0_24 = arith.constant 0 : index
    %c0_25 = arith.constant 0 : index
    %58 = vector.load %arg5[%c0_24, %c0_25] : memref<12x128xbf16, #tpu.memory_space<vmem>>, vector<12x128xbf16>
    %cst_26 = arith.constant dense<0.000000e+00> : vector<8x128xf32>
    %59 = tpu.matmul %57, %58, %cst_26 {dimension_numbers = #tpu.dot_dimension_numbers<[1], [0], [0], [1], [0, 0, 1, 1], [], []>} : vector<8x12xbf16>, vector<12x128xbf16>, vector<8x128xf32> -> vector<8x128xf32>
    %c0_27 = arith.constant 0 : index
    %c0_28 = arith.constant 0 : index
    %60 = vector.load %arg6[%c0_27, %c0_28] : memref<1x128xf32, #tpu.memory_space<vmem>>, vector<1x128xf32>
    %61 = vector.broadcast %60 : vector<1x128xf32> to vector<8x128xf32>
    %62 = arith.addf %59, %61 : vector<8x128xf32>
    %c0_29 = arith.constant 0 : index
    %c0_30 = arith.constant 0 : index
    %c0_31 = arith.constant 0 : index
    %63 = vector.load %arg7[%c0_29, %c0_30, %c0_31] : memref<1x8x128xf32, #tpu.memory_space<vmem>>, vector<1x8x128xf32>
    %64 = vector.shape_cast %63 : vector<1x8x128xf32> to vector<8x128xf32>
    %65 = vector.shape_cast %62 : vector<8x128xf32> to vector<1x8x128xf32>
    tpu.vector_store %arg7[%c0_29, %c0_30, %c0_31], %65 {strides = array<i32>} : memref<1x8x128xf32, #tpu.memory_space<vmem>>, vector<1x8x128xf32>,
    return
  }
  func.func @transform_0(%arg0: i32, %arg1: i32) -> (i32, i32, i32) {
    %c0_i32 = arith.constant 0 : i32
    %c0_i32_0 = arith.constant 0 : i32
    %c0_i32_1 = arith.constant 0 : i32
    return %arg0, %c0_i32, %c0_i32_0 : i32, i32, i32
  }
  func.func @transform_1(%arg0: i32, %arg1: i32) -> (i32, i32) {
    %c0_i32 = arith.constant 0 : i32
    %c0_i32_0 = arith.constant 0 : i32
    %c0_i32_1 = arith.constant 0 : i32
    return %c0_i32, %c0_i32_0 : i32, i32
  }
  func.func @transform_2(%arg0: i32, %arg1: i32) -> (i32, i32) {
    %c0_i32 = arith.constant 0 : i32
    %c0_i32_0 = arith.constant 0 : i32
    %c0_i32_1 = arith.constant 0 : i32
    return %c0_i32, %c0_i32_0 : i32, i32
  }
  func.func @transform_3(%arg0: i32, %arg1: i32) -> (i32, i32) {
    %c0_i32 = arith.constant 0 : i32
    %c0_i32_0 = arith.constant 0 : i32
    %c0_i32_1 = arith.constant 0 : i32
    return %c0_i32, %c0_i32_0 : i32, i32
  }
  func.func @transform_4(%arg0: i32, %arg1: i32) -> (i32, i32) {
    %c0_i32 = arith.constant 0 : i32
    %c0_i32_0 = arith.constant 0 : i32
    %c0_i32_1 = arith.constant 0 : i32
    return %c0_i32, %c0_i32_0 : i32, i32
  }
  func.func @transform_5(%arg0: i32, %arg1: i32) -> (i32, i32, i32) {
    %c0_i32 = arith.constant 0 : i32
    %c0_i32_0 = arith.constant 0 : i32
    return %arg0, %arg1, %c0_i32 : i32, i32, i32
  }
}

</mosaic_0001>

<llo_original>
// kernel: tpu_custom_call.1
$region0: #{tpu_custom_call.1}
  #allocation0 [shape = 'u32[]', space=smem, size = 0x4, offset = 0x4, fixed_abs, tag = 'smem constant byte address 0x4 - core index']
  #allocation1 [shape = 'u32[144,128]{1,0:T(1,128)}', space=vmem, size = 0x12000, scoped, tag = 'internal scratch']
  #allocation2 [shape = 'bf16[8,128]{1,0:T(8,128)(2,1)}', space=vmem, size = 0x800, scoped, tag = 'scratch operand']
  #allocation3 [shape = 'bf16[8,128]{1,0:T(8,128)(2,1)}', space=vmem, size = 0x800, scoped, tag = 'scratch operand']
  #allocation4 [shape = 'bf16[8,128]{1,0:T(8,128)(2,1)}', space=vmem, size = 0x800, scoped, tag = 'scratch operand']
  %s0 = inlined_call_operand.vmem [shape: bf16[2,8,4], index: 0, kind: input, shape index: {}]
  %s1 = inlined_call_operand.vmem [shape: bf16[4,384], index: 1, kind: input, shape index: {}]
  %s2 = inlined_call_operand.vmem [shape: f32[1,384], index: 2, kind: input, shape index: {}]
  %s3 = inlined_call_operand.vmem [shape: bf16[12,128], index: 3, kind: input, shape index: {}]
  %s4 = inlined_call_operand.vmem [shape: f32[1,128], index: 4, kind: input, shape index: {}]
  %s5 = inlined_call_operand.hbm [shape: f32[2,8,128], index: 5, kind: output, shape index: {}]
  %s6 = sld [smem:[#allocation0]]
  $region57: #{tpu_custom_call.1} parent=0
    _
  %s8 = ssub.s32 1, %s6
  %s9 = scalar_select 0, %s8, %s6
  $region1: #{tpu_custom_call.1} parent=0
    #allocation5 [shape = 'u8[8192]{0}', space=vmem, size = 0x2000, scoped, tag = 'output window, operand 0']
    #allocation6 [shape = 's32[2]{0}', space=sflag, size = 0x8, scoped, tag = 'scoped memory for tpu_custom_call.1']
    %10 = vsyncpa [#allocation6], 0
    %s11 = scalar_lea.sflag [#allocation6], 1
    %12 = vsyncpa %s11, 0
    loop: start=0, step=1, limit=4
    $region2: #{tpu_custom_call.1} parent=1 // loop_pre_header
      _
    $region3: #{tpu_custom_call.1} parent=1 // loop_header
      %s14 = sphi 0, %s18
      %p15 = scmp.ge.s32.totalorder %s14, 4
      %s21 = sphi 0, %s33
      %s22 = sphi 0, %s29
      %s23 = sphi 0, %s21
      %s24 = sphi 0, %s22
      %s25 = sphi 0, %s23
      %s26 = sphi 0, %s24
      %s36 = sphi 0, %s38
      %s39 = sphi 0, %s36
      %s40 = sphi 0, %s39
      %s56 = sphi 0, %s40
      %s60 = sphi 0, %s60
      %s62 = sphi 0, %s60
      %s63 = sphi 0, %s62
      %s77 = sphi 0, %s63
      %s81 = sphi 0, %s81
      %s83 = sphi 0, %s81
      %s84 = sphi 0, %s83
      %s98 = sphi 0, %s84
      %s102 = sphi 0, %s102
      %s104 = sphi 0, %s102
      %s105 = sphi 0, %s104
      %s119 = sphi 0, %s105
      %s123 = sphi 0, %s123
      %s125 = sphi 0, %s123
      %s126 = sphi 0, %s125
      %s140 = sphi 0, %s126
      %s148 = sphi 0, %s150
      %s151 = sphi 0, %s148
      %s152 = sphi 0, %s151
      %s168 = sphi 0, %s152
    $region4: #{tpu_custom_call.1} parent=1 // loop_header_branch
      %17 = sbr.rel (%p15) target = $region8
    $region5: #{tpu_custom_call.1} parent=1 // loop_body
      %s19 = ssub.s32 %s14, 1
      %s20 = ssub.s32 %s14, 2
      %s27 = sadd.s32 1, %s22
      %p28 = scmp.ge.s32.totalorder %s27, 1
      %s29 = scalar_select %p28, 0, %s27
      %s30 = sadd.s32 1, %s21
      %s31 = scalar_select %p28, %s30, %s21
      %p32 = scmp.ge.s32.totalorder %s31, 2
      %s33 = scalar_select %p32, 0, %s31
      %s34 = ssub.s32 %s21, %s33
      %p35 = scmp.eq.s32.totalorder %s34, 0
      %s37 = sadd.s32 %s36, 1
      %s38 = scalar_select %p35, %s36, %s37
      %p41 = pneg %p35
      %p42 = scmp.eq.s32.totalorder %s14, 1
      %p43 = por %p41, %p42
      %p44 = scmp.ne.s32.totalorder %s36, %s39
      %p45 = scmp.eq.s32.totalorder %s14, 0
      %p46 = por %p44, %p45
      %p47 = scmp.ne.s32.totalorder %s36, %s39
      %p48 = scmp.eq.s32.totalorder %s19, 1
      %p49 = por %p47, %p48
      %p50 = scmp.ne.s32.totalorder %s39, %s40
      %p51 = scmp.eq.s32.totalorder %s19, 0
      %p52 = por %p50, %p51
      %p53 = scmp.ne.s32.totalorder %s39, %s40
      %p54 = scmp.eq.s32.totalorder %s20, 1
      %p55 = por %p53, %p54
      %p57 = scmp.ne.s32.totalorder %s40, %s56
      %p58 = scmp.eq.s32.totalorder %s20, 0
      %p59 = por %p57, %p58
      %s61 = sadd.s32 %s60, 1
      %p64 = scmp.eq.s32.totalorder %s14, 1
      %p65 = scmp.ne.s32.totalorder %s60, %s62
      %p66 = scmp.eq.s32.totalorder %s14, 0
      %p67 = por %p65, %p66
      %p68 = scmp.ne.s32.totalorder %s60, %s62
      %p69 = scmp.eq.s32.totalorder %s19, 1
      %p70 = por %p68, %p69
      %p71 = scmp.ne.s32.totalorder %s62, %s63
      %p72 = scmp.eq.s32.totalorder %s19, 0
      %p73 = por %p71, %p72
      %p74 = scmp.ne.s32.totalorder %s62, %s63
      %p75 = scmp.eq.s32.totalorder %s20, 1
      %p76 = por %p74, %p75
      %p78 = scmp.ne.s32.totalorder %s63, %s77
      %p79 = scmp.eq.s32.totalorder %s20, 0
      %p80 = por %p78, %p79
      %s82 = sadd.s32 %s81, 1
      %p85 = scmp.eq.s32.totalorder %s14, 1
      %p86 = scmp.ne.s32.totalorder %s81, %s83
      %p87 = scmp.eq.s32.totalorder %s14, 0
      %p88 = por %p86, %p87
      %p89 = scmp.ne.s32.totalorder %s81, %s83
      %p90 = scmp.eq.s32.totalorder %s19, 1
      %p91 = por %p89, %p90
      %p92 = scmp.ne.s32.totalorder %s83, %s84
      %p93 = scmp.eq.s32.totalorder %s19, 0
      %p94 = por %p92, %p93
      %p95 = scmp.ne.s32.totalorder %s83, %s84
      %p96 = scmp.eq.s32.totalorder %s20, 1
      %p97 = por %p95, %p96
      %p99 = scmp.ne.s32.totalorder %s84, %s98
      %p100 = scmp.eq.s32.totalorder %s20, 0
      %p101 = por %p99, %p100
      %s103 = sadd.s32 %s102, 1
      %p106 = scmp.eq.s32.totalorder %s14, 1
      %p107 = scmp.ne.s32.totalorder %s102, %s104
      %p108 = scmp.eq.s32.totalorder %s14, 0
      %p109 = por %p107, %p108
      %p110 = scmp.ne.s32.totalorder %s102, %s104
      %p111 = scmp.eq.s32.totalorder %s19, 1
      %p112 = por %p110, %p111
      %p113 = scmp.ne.s32.totalorder %s104, %s105
      %p114 = scmp.eq.s32.totalorder %s19, 0
      %p115 = por %p113, %p114
      %p116 = scmp.ne.s32.totalorder %s104, %s105
      %p117 = scmp.eq.s32.totalorder %s20, 1
      %p118 = por %p116, %p117
      %p120 = scmp.ne.s32.totalorder %s105, %s119
      %p121 = scmp.eq.s32.totalorder %s20, 0
      %p122 = por %p120, %p121
      %s124 = sadd.s32 %s123, 1
      %p127 = scmp.eq.s32.totalorder %s14, 1
      %p128 = scmp.ne.s32.totalorder %s123, %s125
      %p129 = scmp.eq.s32.totalorder %s14, 0
      %p130 = por %p128, %p129
      %p131 = scmp.ne.s32.totalorder %s123, %s125
      %p132 = scmp.eq.s32.totalorder %s19, 1
      %p133 = por %p131, %p132
      %p134 = scmp.ne.s32.totalorder %s125, %s126
      %p135 = scmp.eq.s32.totalorder %s19, 0
      %p136 = por %p134, %p135
      %p137 = scmp.ne.s32.totalorder %s125, %s126
      %p138 = scmp.eq.s32.totalorder %s20, 1
      %p139 = por %p137, %p138
      %p141 = scmp.ne.s32.totalorder %s126, %s140
      %p142 = scmp.eq.s32.totalorder %s20, 0
      %p143 = por %p141, %p142
      %s144 = ssub.s32 %s21, %s33
      %s145 = ssub.s32 %s22, %s29
      %s146 = sor.u32 %s144, %s145
      %p147 = scmp.eq.s32.totalorder %s146, 0
      %s149 = sadd.s32 %s148, 1
      %s150 = scalar_select %p147, %s148, %s149
      %p153 = pneg %p147
      %p154 = scmp.eq.s32.totalorder %s14, 1
      %p155 = por %p153, %p154
      %p156 = scmp.ne.s32.totalorder %s148, %s151
      %p157 = scmp.eq.s32.totalorder %s14, 0
      %p158 = por %p156, %p157
      %p159 = scmp.ne.s32.totalorder %s148, %s151
      %p160 = scmp.eq.s32.totalorder %s19, 1
      %p161 = por %p159, %p160
      %p162 = scmp.ne.s32.totalorder %s151, %s152
      %p163 = scmp.eq.s32.totalorder %s19, 0
      %p164 = por %p162, %p163
      %p165 = scmp.ne.s32.totalorder %s151, %s152
      %p166 = scmp.eq.s32.totalorder %s20, 1
      %p167 = por %p165, %p166
      %p169 = scmp.ne.s32.totalorder %s152, %s168
      %p170 = scmp.eq.s32.totalorder %s20, 0
      %p171 = por %p169, %p170
      %p172 = scmp.le.s32.totalorder 1, %s14
      %p173 = scmp.lt.s32.totalorder %s14, 3
      %p174 = pnand %p172, %p173
      %p175 = pneg %p174
      // Predicated region
      $region9: #{tpu_custom_call.1} parent=5 // pred_check
        _
      $region10: #{tpu_custom_call.1} parent=5 // pred_check_branch
        %177 = sbr.rel (%p174) target = $region12
      $region11: #{tpu_custom_call.1} parent=5 // pred_region
        %s178 = ssub.s32 %s14, 1
        // Predicated region
        $region13: #{tpu_custom_call.1} parent=11 // pred_check
          %p179 = pneg %p73
        $region14: #{tpu_custom_call.1} parent=11 // pred_check_branch
          %181 = sbr.rel (%p179) target = $region16
        $region15: #{tpu_custom_call.1} parent=11 // pred_region
          _
        $region16: #{tpu_custom_call.1} parent=11 // pred_fallthru
          _
        // Predicated region
        $region17: #{tpu_custom_call.1} parent=11 // pred_check
          %p182 = pneg %p94
        $region18: #{tpu_custom_call.1} parent=11 // pred_check_branch
          %184 = sbr.rel (%p182) target = $region20
        $region19: #{tpu_custom_call.1} parent=11 // pred_region
          _
        $region20: #{tpu_custom_call.1} parent=11 // pred_fallthru
          _
        // Predicated region
        $region21: #{tpu_custom_call.1} parent=11 // pred_check
          %p185 = pneg %p115
        $region22: #{tpu_custom_call.1} parent=11 // pred_check_branch
          %187 = sbr.rel (%p185) target = $region24
        $region23: #{tpu_custom_call.1} parent=11 // pred_region
          _
        $region24: #{tpu_custom_call.1} parent=11 // pred_fallthru
          _
        // Predicated region
        $region25: #{tpu_custom_call.1} parent=11 // pred_check
          %p188 = pneg %p136
        $region26: #{tpu_custom_call.1} parent=11 // pred_check_branch
          %190 = sbr.rel (%p188) target = $region28
        $region27: #{tpu_custom_call.1} parent=11 // pred_region
          _
        $region28: #{tpu_custom_call.1} parent=11 // pred_fallthru
          _
      $region12: #{tpu_custom_call.1} parent=5 // pred_fallthru
        _
      %p191 = scmp.lt.s32.totalorder %s14, 2
      // Predicated region
      $region29: #{tpu_custom_call.1} parent=5 // pred_check
        %p192 = pneg %p191
      $region30: #{tpu_custom_call.1} parent=5 // pred_check_branch
        %194 = sbr.rel (%p192) target = $region32
      $region31: #{tpu_custom_call.1} parent=5 // pred_region
        // Predicated region
        $region33: #{tpu_custom_call.1} parent=31 // pred_check
          %p195 = pneg %p46
        $region34: #{tpu_custom_call.1} parent=31 // pred_check_branch
          %197 = sbr.rel (%p195) target = $region36
        $region35: #{tpu_custom_call.1} parent=31 // pred_region
          %p198 = scmp.lt.s32.totalorder %s21, 1
          %s199 = scalar_select %p198, %s21, 1
          %s200 = smul.addr %s199, 4
          %s201 = scalar_lea.vmem %s0, %s200
        $region36: #{tpu_custom_call.1} parent=31 // pred_fallthru
          _
      $region32: #{tpu_custom_call.1} parent=5 // pred_fallthru
        _
      %p202 = scmp.le.s32.totalorder 1, %s14
      %p203 = scmp.lt.s32.totalorder %s14, 3
      %p204 = pnand %p202, %p203
      %p205 = pneg %p204
      // Predicated region
      $region37: #{tpu_custom_call.1} parent=5 // pred_check
        _
      $region38: #{tpu_custom_call.1} parent=5 // pred_check_branch
        %207 = sbr.rel (%p204) target = $region40
      $region39: #{tpu_custom_call.1} parent=5 // pred_region
        %s208 = ssub.s32 %s14, 1
        %p209 = scmp.lt.s32.totalorder %s23, 1
        %s210 = scalar_select %p209, %s23, 1
        %s211 = smul.addr %s210, 4
        %s212 = scalar_lea.vmem %s0, %s211
        %p213 = pneg %p52
        %p214 = pneg %p49
        %p215 = pneg %p73
        %p216 = pneg %p70
        %p217 = pneg %p94
        %p218 = pneg %p91
        %p219 = pneg %p115
        %p220 = pneg %p112
        %p221 = pneg %p136
        %p222 = pneg %p133
        %p223 = pneg %p164
        %p224 = pneg %p161
        %s225 = sand.u32 %s151, 1
        %s226 = scalar_lea.sflag [#allocation6], %s225
        %s227 = sand.u32 %s151, 1
        %s228 = smul.addr %s227, 8
        %s229 = scalar_lea.vmem [#allocation5], %s228
        %p230 = scmp.lt.s32.totalorder %s23, 1
        %s231 = scalar_select %p230, %s23, 1
        %s232 = smul.addr %s231, 4
        %s233 = scalar_lea.vmem %s0, %s232
        %p235 = scmp.eq.s32.totalorder %s24, 0
        // Predicated region
        $region41: #{tpu_custom_call.1} parent=39 // pred_check
          %p236 = pneg %p235
        $region42: #{tpu_custom_call.1} parent=39 // pred_check_branch
          %238 = sbr.rel (%p236) target = $region44
        $region43: #{tpu_custom_call.1} parent=39 // pred_region
          %v239 = vld [vmem:[%s233] sm:$0xf]
          %v240 = vld [vmem:[%s1] sm:$0x3f]
          %v241 = vld [vmem:[%s2] sm:$0x7]
          %v243 = vlaneseq
          %v244 = vshrl.u32 %v243, 7
          %v245 = vsub.s32 0, %v244
          %v246 = vrot.slane %v241, %v245
          %v247 = vlaneseq
          %v248 = vshrl.u32 %v247, 7
          %v249 = vsub.s32 1, %v248
          %v250 = vrot.slane %v241, %v249
          %v251 = vlaneseq
          %v252 = vshrl.u32 %v251, 7
          %v253 = vsub.s32 2, %v252
          %v254 = vrot.slane %v241, %v253
          %v259 = vcombine.high %v240, %v240
          %v261 = vunpack.c.l.s4 1983009808
          %v262 = vunpack.c.0.s8 %v261
          %v263 = vlaneseq
          %v264 = vshrl.u32 %v263, 7
          %v265 = vsub.s32 %v262, %v264
          %v266 = vrot.slane %v240, %v265
          %v268 = vunpack.c.l.s4 1983009808
          %v269 = vunpack.c.0.s8 %v268
          %v270 = vlaneseq
          %v271 = vshrl.u32 %v270, 7
          %v272 = vsub.s32 %v269, %v271
          %v273 = vrot.slane %v259, %v272
          %v274 = vcombine.high %v266, %v266
          %vm275 = vcmask 31744
          %v277 = vsel %vm275, %v239, 0
          %vm279 = vcmask 1041408
          %v281 = vsel %vm279, %v266, 0
          %v284 = vsel %vm279, %v274, 0
          %v287 = vsel %vm279, %v273, 0
          %289 = vmatprep.subr.bf16.mxu0 %v284
          %290 = vmatpush1.bf16.msra.mxu0 %v281
          %291 = vmatprep.subr.bf16.mxu0 0
          %292 = vmatpush1.bf16.msra.mxu0 0
          %293 = vmatprep.subr.bf16.mxu0 0
          %294 = vmatpush1.bf16.msra.mxu0 0
          %295 = vmatprep.subr.bf16.mxu0 0
          %296 = vmatpush1.bf16.msra.mxu0 0
          %297 = vmatprep.subr.bf16.mxu0 0
          %298 = vmatpush1.bf16.msra.mxu0 0
          %299 = vmatprep.subr.bf16.mxu0 0
          %300 = vmatpush1.bf16.msra.mxu0 0
          %301 = vmatprep.subr.bf16.mxu0 0
          %302 = vmatpush1.bf16.msra.mxu0 0
          %303 = vmatprep.subr.bf16.mxu0 0
          %304 = vmatpush1.bf16.msra.mxu0 0
          %305 = vmatprep.subr.bf16.mxu0 0
          %306 = vmatpush1.bf16.msra.mxu0 0
          %307 = vmatprep.subr.bf16.mxu0 0
          %308 = vmatpush1.bf16.msra.mxu0 0
          %309 = vmatprep.subr.bf16.mxu0 0
          %310 = vmatpush1.bf16.msra.mxu0 0
          %311 = vmatprep.subr.bf16.mxu0 0
          %312 = vmatpush1.bf16.msra.mxu0 0
          %313 = vmatprep.subr.bf16.mxu0 0
          %314 = vmatpush1.bf16.msra.mxu0 0
          %315 = vmatprep.subr.bf16.mxu0 0
          %316 = vmatpush1.bf16.msra.mxu0 0
          %317 = vmatprep.subr.bf16.mxu0 0
          %318 = vmatpush1.bf16.msra.mxu0 0
          %319 = vmatprep.subr.bf16.mxu0 0
          %320 = vmatpush1.bf16.msra.mxu0 0
          %321 = vmatprep.mubr.bf16.mxu0 0
          %322 = vmatmul.mubr.bf16.gmra.mrb[0].mxu0 %v277
          %v323 = vpop.f32.mrb[0].mxu0
          %v324 = vadd.f32 %v246, %v323
          %v325 = vpop.f32.mrb[0].mxu0
          %v326 = vadd.f32 %v250, %v325
          %v327 = vpop.f32.mrb[0].mxu0
          %v328 = vpop.f32.mrb[0].mxu0
          %329 = vdwg.mxu0
          %330 = vmatprep.subr.bf16.mxu0 0
          %331 = vmatpush1.bf16.msra.mxu0 %v287
          %332 = vmatprep.subr.bf16.mxu0 0
          %333 = vmatpush1.bf16.msra.mxu0 0
          %334 = vmatprep.subr.bf16.mxu0 0
          %335 = vmatpush1.bf16.msra.mxu0 0
          %336 = vmatprep.subr.bf16.mxu0 0
          %337 = vmatpush1.bf16.msra.mxu0 0
          %338 = vmatprep.subr.bf16.mxu0 0
          %339 = vmatpush1.bf16.msra.mxu0 0
          %340 = vmatprep.subr.bf16.mxu0 0
          %341 = vmatpush1.bf16.msra.mxu0 0
          %342 = vmatprep.subr.bf16.mxu0 0
          %343 = vmatpush1.bf16.msra.mxu0 0
          %344 = vmatprep.subr.bf16.mxu0 0
          %345 = vmatpush1.bf16.msra.mxu0 0
          %346 = vmatprep.subr.bf16.mxu0 0
          %347 = vmatpush1.bf16.msra.mxu0 0
          %348 = vmatprep.subr.bf16.mxu0 0
          %349 = vmatpush1.bf16.msra.mxu0 0
          %350 = vmatprep.subr.bf16.mxu0 0
          %351 = vmatpush1.bf16.msra.mxu0 0
          %352 = vmatprep.subr.bf16.mxu0 0
          %353 = vmatpush1.bf16.msra.mxu0 0
          %354 = vmatprep.subr.bf16.mxu0 0
          %355 = vmatpush1.bf16.msra.mxu0 0
          %356 = vmatprep.subr.bf16.mxu0 0
          %357 = vmatpush1.bf16.msra.mxu0 0
          %358 = vmatprep.subr.bf16.mxu0 0
          %359 = vmatpush1.bf16.msra.mxu0 0
          %360 = vmatprep.subr.bf16.mxu0 0
          %361 = vmatpush1.bf16.msra.mxu0 0
          %362 = vmatprep.mubr.bf16.mxu0 0
          %363 = vmatmul.mubr.bf16.gmra.mrb[0].mxu0 %v277
          %v364 = vpop.f32.mrb[0].mxu0
          %v365 = vadd.f32 %v254, %v364
          %v366 = vpop.f32.mrb[0].mxu0
          %v367 = vpop.f32.mrb[0].mxu0
          %v368 = vpop.f32.mrb[0].mxu0
          %369 = vdwg.mxu0
          %v370 = vpack.c.bf16 %v324, %v324
          %v371 = vpack.c.bf16 %v326, %v326
          %v372 = vpack.c.bf16 %v365, %v365
          %373 = vst [vmem:[#allocation2] sm:$0xf] %v370
          %374 = vst [vmem:[#allocation3] sm:$0xf] %v371
          %375 = vst [vmem:[#allocation4] sm:$0xf] %v372
        $region44: #{tpu_custom_call.1} parent=39 // pred_fallthru
          _
        %s376 = smul.u32 %s24, 8
        %s377 = sshra.s32 %s376, 3
        %s378 = sand.u32 %s376, 7
        %s379 = smul.addr %s377, 4
        %s380 = scalar_lea.vmem [#allocation2], %s379
        %v381 = vld [vmem:[%s380] sm:$0xf]
        %v382 = vld [vmem:[#allocation3] sm:$0xf]
        %v383 = vld [vmem:[#allocation4] sm:$0xf]
        %vm384 = vcmask 31744
        %v386 = vsel %vm384, %v381, 0
        %v389 = vsel %vm384, %v382, 0
        %391 = vmatprep.subr.bf16.mxu0 0
        %392 = vmatpush1.bf16.xpose.msra.mxu0 %v389
        %393 = vmatprep.subr.bf16.mxu0 0
        %394 = vmatpush1.bf16.xpose.msra.mxu0 0
        %395 = vmatprep.subr.bf16.mxu0 0
        %396 = vmatpush1.bf16.xpose.msra.mxu0 0
        %397 = vmatprep.subr.bf16.mxu0 0
        %398 = vmatpush1.bf16.xpose.msra.mxu0 0
        %399 = vmatprep.subr.bf16.mxu0 0
        %400 = vmatpush1.bf16.xpose.msra.mxu0 0
        %401 = vmatprep.subr.bf16.mxu0 0
        %402 = vmatpush1.bf16.xpose.msra.mxu0 0
        %403 = vmatprep.subr.bf16.mxu0 0
        %404 = vmatpush1.bf16.xpose.msra.mxu0 0
        %405 = vmatprep.subr.bf16.mxu0 0
        %406 = vmatpush1.bf16.xpose.msra.mxu0 0
        %407 = vmatprep.subr.bf16.mxu0 0
        %408 = vmatpush1.bf16.xpose.msra.mxu0 0
        %409 = vmatprep.subr.bf16.mxu0 0
        %410 = vmatpush1.bf16.xpose.msra.mxu0 0
        %411 = vmatprep.subr.bf16.mxu0 0
        %412 = vmatpush1.bf16.xpose.msra.mxu0 0
        %413 = vmatprep.subr.bf16.mxu0 0
        %414 = vmatpush1.bf16.xpose.msra.mxu0 0
        %415 = vmatprep.subr.bf16.mxu0 0
        %416 = vmatpush1.bf16.xpose.msra.mxu0 0
        %417 = vmatprep.subr.bf16.mxu0 0
        %418 = vmatpush1.bf16.xpose.msra.mxu0 0
        %419 = vmatprep.subr.bf16.mxu0 0
        %420 = vmatpush1.bf16.xpose.msra.mxu0 0
        %421 = vmatprep.subr.bf16.mxu0 0
        %422 = vmatpush1.bf16.xpose.msra.mxu0 0
        %423 = vmatprep.mubr.bf16.mxu0 0
        %424 = vmatmul.mubr.bf16.gmra.mrb[0].mxu0 %v386
        %v425 = vpop.f32.mrb[0].mxu0
        %v426 = vadd.f32 0.0, %v425
        %v427 = vpop.f32.mrb[0].mxu0
        %v428 = vpop.f32.mrb[0].mxu0
        %v429 = vpop.f32.mrb[0].mxu0
        %430 = vdwg.mxu0
        %vm431 = vcmask 64512
        %v432 = vsel %vm431, %v426, -inf
        %433 = vmax.xlane.f32.xlu0 %v432
        %v434 = vpop.xlane.xlu0 %433
        %v435 = vsub.f32 %v426, %v434
        %v436 = vmul.f32 %v435, 1.442695
        %v437 = vpow.pop %v436
        %v438 = vsel %vm431, %v437, 0.0
        %439 = vadd.xlane.f32.xlu0 %v438
        %v440 = vpop.xlane.xlu0 %439
        %v441 = vrcp.pop %v440
        %v442 = vpack.c.bf16 %v437, %v437
        %v444 = vsel %vm431, %v442, 0
        %vm446 = vcmask 1043456
        %v448 = vsel %vm446, %v383, 0
        %450 = vmatprep.subr.bf16.mxu0 0
        %451 = vmatpush1.bf16.msra.mxu0 %v448
        %452 = vmatprep.subr.bf16.mxu0 0
        %453 = vmatpush1.bf16.msra.mxu0 0
        %454 = vmatprep.subr.bf16.mxu0 0
        %455 = vmatpush1.bf16.msra.mxu0 0
        %456 = vmatprep.subr.bf16.mxu0 0
        %457 = vmatpush1.bf16.msra.mxu0 0
        %458 = vmatprep.subr.bf16.mxu0 0
        %459 = vmatpush1.bf16.msra.mxu0 0
        %460 = vmatprep.subr.bf16.mxu0 0
        %461 = vmatpush1.bf16.msra.mxu0 0
        %462 = vmatprep.subr.bf16.mxu0 0
        %463 = vmatpush1.bf16.msra.mxu0 0
        %464 = vmatprep.subr.bf16.mxu0 0
        %465 = vmatpush1.bf16.msra.mxu0 0
        %466 = vmatprep.subr.bf16.mxu0 0
        %467 = vmatpush1.bf16.msra.mxu0 0
        %468 = vmatprep.subr.bf16.mxu0 0
        %469 = vmatpush1.bf16.msra.mxu0 0
        %470 = vmatprep.subr.bf16.mxu0 0
        %471 = vmatpush1.bf16.msra.mxu0 0
        %472 = vmatprep.subr.bf16.mxu0 0
        %473 = vmatpush1.bf16.msra.mxu0 0
        %474 = vmatprep.subr.bf16.mxu0 0
        %475 = vmatpush1.bf16.msra.mxu0 0
        %476 = vmatprep.subr.bf16.mxu0 0
        %477 = vmatpush1.bf16.msra.mxu0 0
        %478 = vmatprep.subr.bf16.mxu0 0
        %479 = vmatpush1.bf16.msra.mxu0 0
        %480 = vmatprep.subr.bf16.mxu0 0
        %481 = vmatpush1.bf16.msra.mxu0 0
        %482 = vmatprep.mubr.bf16.mxu0 0
        %483 = vmatmul.mubr.bf16.gmra.mrb[0].mxu0 %v444
        %v484 = vpop.f32.mrb[0].mxu0
        %v485 = vadd.f32 0.0, %v484
        %v486 = vpop.f32.mrb[0].mxu0
        %v487 = vpop.f32.mrb[0].mxu0
        %v488 = vpop.f32.mrb[0].mxu0
        %489 = vdwg.mxu0
        %v490 = vmul.f32 %v485, %v441
        %v492 = vunpack.c.l.b16 %v381
        %v493 = vpack.c.b16 %v492, %v492
        %494 = vrot.lane.b32.xlu0 %v493, 124
        %v495 = vpop.permute.xlu0 %494
        %v497 = vunpack.c.l.b16 %v382
        %v498 = vpack.c.b16 %v497, %v497
        %499 = vrot.lane.b32.xlu0 %v498, 124
        %v500 = vpop.permute.xlu0 %499
        %v502 = vsel %vm384, %v495, 0
        %v505 = vsel %vm384, %v500, 0
        %507 = vmatprep.subr.bf16.mxu0 0
        %508 = vmatpush1.bf16.xpose.msra.mxu0 %v505
        %509 = vmatprep.subr.bf16.mxu0 0
        %510 = vmatpush1.bf16.xpose.msra.mxu0 0
        %511 = vmatprep.subr.bf16.mxu0 0
        %512 = vmatpush1.bf16.xpose.msra.mxu0 0
        %513 = vmatprep.subr.bf16.mxu0 0
        %514 = vmatpush1.bf16.xpose.msra.mxu0 0
        %515 = vmatprep.subr.bf16.mxu0 0
        %516 = vmatpush1.bf16.xpose.msra.mxu0 0
        %517 = vmatprep.subr.bf16.mxu0 0
        %518 = vmatpush1.bf16.xpose.msra.mxu0 0
        %519 = vmatprep.subr.bf16.mxu0 0
        %520 = vmatpush1.bf16.xpose.msra.mxu0 0
        %521 = vmatprep.subr.bf16.mxu0 0
        %522 = vmatpush1.bf16.xpose.msra.mxu0 0
        %523 = vmatprep.subr.bf16.mxu0 0
        %524 = vmatpush1.bf16.xpose.msra.mxu0 0
        %525 = vmatprep.subr.bf16.mxu0 0
        %526 = vmatpush1.bf16.xpose.msra.mxu0 0
        %527 = vmatprep.subr.bf16.mxu0 0
        %528 = vmatpush1.bf16.xpose.msra.mxu0 0
        %529 = vmatprep.subr.bf16.mxu0 0
        %530 = vmatpush1.bf16.xpose.msra.mxu0 0
        %531 = vmatprep.subr.bf16.mxu0 0
        %532 = vmatpush1.bf16.xpose.msra.mxu0 0
        %533 = vmatprep.subr.bf16.mxu0 0
        %534 = vmatpush1.bf16.xpose.msra.mxu0 0
        %535 = vmatprep.subr.bf16.mxu0 0
        %536 = vmatpush1.bf16.xpose.msra.mxu0 0
        %537 = vmatprep.subr.bf16.mxu0 0
        %538 = vmatpush1.bf16.xpose.msra.mxu0 0
        %539 = vmatprep.mubr.bf16.mxu0 0
        %540 = vmatmul.mubr.bf16.gmra.mrb[0].mxu0 %v502
        %v541 = vpop.f32.mrb[0].mxu0
        %v542 = vadd.f32 0.0, %v541
        %v543 = vpop.f32.mrb[0].mxu0
        %v544 = vpop.f32.mrb[0].mxu0
        %v545 = vpop.f32.mrb[0].mxu0
        %546 = vdwg.mxu0
        %v547 = vsel %vm431, %v542, -inf
        %548 = vmax.xlane.f32.xlu0 %v547
        %v549 = vpop.xlane.xlu0 %548
        %v550 = vsub.f32 %v542, %v549
        %v551 = vmul.f32 %v550, 1.442695
        %v552 = vpow.pop %v551
        %v553 = vsel %vm431, %v552, 0.0
        %554 = vadd.xlane.f32.xlu0 %v553
        %v555 = vpop.xlane.xlu0 %554
        %v556 = vrcp.pop %v555
        %v557 = vpack.c.bf16 %v552, %v552
        %v559 = vunpack.c.l.b16 %v383
        %v560 = vpack.c.b16 %v559, %v559
        %561 = vrot.lane.b32.xlu0 %v560, 124
        %v562 = vpop.permute.xlu0 %561
        %v564 = vsel %vm431, %v557, 0
        %v567 = vsel %vm446, %v562, 0
        %569 = vmatprep.subr.bf16.mxu0 0
        %570 = vmatpush1.bf16.msra.mxu0 %v567
        %571 = vmatprep.subr.bf16.mxu0 0
        %572 = vmatpush1.bf16.msra.mxu0 0
        %573 = vmatprep.subr.bf16.mxu0 0
        %574 = vmatpush1.bf16.msra.mxu0 0
        %575 = vmatprep.subr.bf16.mxu0 0
        %576 = vmatpush1.bf16.msra.mxu0 0
        %577 = vmatprep.subr.bf16.mxu0 0
        %578 = vmatpush1.bf16.msra.mxu0 0
        %579 = vmatprep.subr.bf16.mxu0 0
        %580 = vmatpush1.bf16.msra.mxu0 0
        %581 = vmatprep.subr.bf16.mxu0 0
        %582 = vmatpush1.bf16.msra.mxu0 0
        %583 = vmatprep.subr.bf16.mxu0 0
        %584 = vmatpush1.bf16.msra.mxu0 0
        %585 = vmatprep.subr.bf16.mxu0 0
        %586 = vmatpush1.bf16.msra.mxu0 0
        %587 = vmatprep.subr.bf16.mxu0 0
        %588 = vmatpush1.bf16.msra.mxu0 0
        %589 = vmatprep.subr.bf16.mxu0 0
        %590 = vmatpush1.bf16.msra.mxu0 0
        %591 = vmatprep.subr.bf16.mxu0 0
        %592 = vmatpush1.bf16.msra.mxu0 0
        %593 = vmatprep.subr.bf16.mxu0 0
        %594 = vmatpush1.bf16.msra.mxu0 0
        %595 = vmatprep.subr.bf16.mxu0 0
        %596 = vmatpush1.bf16.msra.mxu0 0
        %597 = vmatprep.subr.bf16.mxu0 0
        %598 = vmatpush1.bf16.msra.mxu0 0
        %599 = vmatprep.subr.bf16.mxu0 0
        %600 = vmatpush1.bf16.msra.mxu0 0
        %601 = vmatprep.mubr.bf16.mxu0 0
        %602 = vmatmul.mubr.bf16.gmra.mrb[0].mxu0 %v564
        %v603 = vpop.f32.mrb[0].mxu0
        %v604 = vadd.f32 0.0, %v603
        %v605 = vpop.f32.mrb[0].mxu0
        %v606 = vpop.f32.mrb[0].mxu0
        %v607 = vpop.f32.mrb[0].mxu0
        %608 = vdwg.mxu0
        %v609 = vmul.f32 %v604, %v556
        %610 = vrot.lane.b32.xlu0 %v493, 120
        %v611 = vpop.permute.xlu0 %610
        %612 = vrot.lane.b32.xlu0 %v498, 120
        %v613 = vpop.permute.xlu0 %612
        %v615 = vsel %vm384, %v611, 0
        %v618 = vsel %vm384, %v613, 0
        %620 = vmatprep.subr.bf16.mxu0 0
        %621 = vmatpush1.bf16.xpose.msra.mxu0 %v618
        %622 = vmatprep.subr.bf16.mxu0 0
        %623 = vmatpush1.bf16.xpose.msra.mxu0 0
        %624 = vmatprep.subr.bf16.mxu0 0
        %625 = vmatpush1.bf16.xpose.msra.mxu0 0
        %626 = vmatprep.subr.bf16.mxu0 0
        %627 = vmatpush1.bf16.xpose.msra.mxu0 0
        %628 = vmatprep.subr.bf16.mxu0 0
        %629 = vmatpush1.bf16.xpose.msra.mxu0 0
        %630 = vmatprep.subr.bf16.mxu0 0
        %631 = vmatpush1.bf16.xpose.msra.mxu0 0
        %632 = vmatprep.subr.bf16.mxu0 0
        %633 = vmatpush1.bf16.xpose.msra.mxu0 0
        %634 = vmatprep.subr.bf16.mxu0 0
        %635 = vmatpush1.bf16.xpose.msra.mxu0 0
        %636 = vmatprep.subr.bf16.mxu0 0
        %637 = vmatpush1.bf16.xpose.msra.mxu0 0
        %638 = vmatprep.subr.bf16.mxu0 0
        %639 = vmatpush1.bf16.xpose.msra.mxu0 0
        %640 = vmatprep.subr.bf16.mxu0 0
        %641 = vmatpush1.bf16.xpose.msra.mxu0 0
        %642 = vmatprep.subr.bf16.mxu0 0
        %643 = vmatpush1.bf16.xpose.msra.mxu0 0
        %644 = vmatprep.subr.bf16.mxu0 0
        %645 = vmatpush1.bf16.xpose.msra.mxu0 0
        %646 = vmatprep.subr.bf16.mxu0 0
        %647 = vmatpush1.bf16.xpose.msra.mxu0 0
        %648 = vmatprep.subr.bf16.mxu0 0
        %649 = vmatpush1.bf16.xpose.msra.mxu0 0
        %650 = vmatprep.subr.bf16.mxu0 0
        %651 = vmatpush1.bf16.xpose.msra.mxu0 0
        %652 = vmatprep.mubr.bf16.mxu0 0
        %653 = vmatmul.mubr.bf16.gmra.mrb[0].mxu0 %v615
        %v654 = vpop.f32.mrb[0].mxu0
        %v655 = vadd.f32 0.0, %v654
        %v656 = vpop.f32.mrb[0].mxu0
        %v657 = vpop.f32.mrb[0].mxu0
        %v658 = vpop.f32.mrb[0].mxu0
        %659 = vdwg.mxu0
        %v660 = vsel %vm431, %v655, -inf
        %661 = vmax.xlane.f32.xlu0 %v660
        %v662 = vpop.xlane.xlu0 %661
        %v663 = vsub.f32 %v655, %v662
        %v664 = vmul.f32 %v663, 1.442695
        %v665 = vpow.pop %v664
        %v666 = vsel %vm431, %v665, 0.0
        %667 = vadd.xlane.f32.xlu0 %v666
        %v668 = vpop.xlane.xlu0 %667
        %v669 = vrcp.pop %v668
        %v670 = vpack.c.bf16 %v665, %v665
        %671 = vrot.lane.b32.xlu0 %v560, 120
        %v672 = vpop.permute.xlu0 %671
        %v674 = vsel %vm431, %v670, 0
        %v677 = vsel %vm446, %v672, 0
        %679 = vmatprep.subr.bf16.mxu0 0
        %680 = vmatpush1.bf16.msra.mxu0 %v677
        %681 = vmatprep.subr.bf16.mxu0 0
        %682 = vmatpush1.bf16.msra.mxu0 0
        %683 = vmatprep.subr.bf16.mxu0 0
        %684 = vmatpush1.bf16.msra.mxu0 0
        %685 = vmatprep.subr.bf16.mxu0 0
        %686 = vmatpush1.bf16.msra.mxu0 0
        %687 = vmatprep.subr.bf16.mxu0 0
        %688 = vmatpush1.bf16.msra.mxu0 0
        %689 = vmatprep.subr.bf16.mxu0 0
        %690 = vmatpush1.bf16.msra.mxu0 0
        %691 = vmatprep.subr.bf16.mxu0 0
        %692 = vmatpush1.bf16.msra.mxu0 0
        %693 = vmatprep.subr.bf16.mxu0 0
        %694 = vmatpush1.bf16.msra.mxu0 0
        %695 = vmatprep.subr.bf16.mxu0 0
        %696 = vmatpush1.bf16.msra.mxu0 0
        %697 = vmatprep.subr.bf16.mxu0 0
        %698 = vmatpush1.bf16.msra.mxu0 0
        %699 = vmatprep.subr.bf16.mxu0 0
        %700 = vmatpush1.bf16.msra.mxu0 0
        %701 = vmatprep.subr.bf16.mxu0 0
        %702 = vmatpush1.bf16.msra.mxu0 0
        %703 = vmatprep.subr.bf16.mxu0 0
        %704 = vmatpush1.bf16.msra.mxu0 0
        %705 = vmatprep.subr.bf16.mxu0 0
        %706 = vmatpush1.bf16.msra.mxu0 0
        %707 = vmatprep.subr.bf16.mxu0 0
        %708 = vmatpush1.bf16.msra.mxu0 0
        %709 = vmatprep.subr.bf16.mxu0 0
        %710 = vmatpush1.bf16.msra.mxu0 0
        %711 = vmatprep.mubr.bf16.mxu0 0
        %712 = vmatmul.mubr.bf16.gmra.mrb[0].mxu0 %v674
        %v713 = vpop.f32.mrb[0].mxu0
        %v714 = vadd.f32 0.0, %v713
        %v715 = vpop.f32.mrb[0].mxu0
        %v716 = vpop.f32.mrb[0].mxu0
        %v717 = vpop.f32.mrb[0].mxu0
        %718 = vdwg.mxu0
        %v719 = vmul.f32 %v714, %v669
        %721 = vrot.lane.b32.xlu0 %v609, 4
        %v722 = vpop.permute.xlu0 %721
        %725 = vrot.lane.b32.xlu0 %v719, 8
        %v726 = vpop.permute.xlu0 %725
        %v728 = vsel %vm384, %v490, %v722
        %v729 = vsel %vm431, %v728, %v726
        %v730 = vpack.c.bf16 %v729, %v729
        %v731 = vld [vmem:[%s3] sm:$0xf]
        %v732 = vld [vmem:[%s3 + $0x4] sm:$0x3]
        %v733 = vld [vmem:[%s4] sm:$0x1]
        %v735 = vlaneseq
        %v736 = vshrl.u32 %v735, 7
        %v737 = vsub.s32 0, %v736
        %v738 = vrot.slane %v733, %v737
        %v742 = vunpack.c.l.b16 %v731
        %v743 = vunpack.c.l.b16 %v732
        %v744 = vpack.c.b16 %v743, %v742
        %vm745 = vcmask 97280
        %v747 = vsel %vm745, %v730, 0
        %vm749 = vcmask 1045504
        %v751 = vsel %vm749, %v744, 0
        %753 = vmatprep.subr.bf16.mxu0 0
        %754 = vmatpush1.bf16.msra.mxu0 %v751
        %755 = vmatprep.subr.bf16.mxu0 0
        %756 = vmatpush1.bf16.msra.mxu0 0
        %757 = vmatprep.subr.bf16.mxu0 0
        %758 = vmatpush1.bf16.msra.mxu0 0
        %759 = vmatprep.subr.bf16.mxu0 0
        %760 = vmatpush1.bf16.msra.mxu0 0
        %761 = vmatprep.subr.bf16.mxu0 0
        %762 = vmatpush1.bf16.msra.mxu0 0
        %763 = vmatprep.subr.bf16.mxu0 0
        %764 = vmatpush1.bf16.msra.mxu0 0
        %765 = vmatprep.subr.bf16.mxu0 0
        %766 = vmatpush1.bf16.msra.mxu0 0
        %767 = vmatprep.subr.bf16.mxu0 0
        %768 = vmatpush1.bf16.msra.mxu0 0
        %769 = vmatprep.subr.bf16.mxu0 0
        %770 = vmatpush1.bf16.msra.mxu0 0
        %771 = vmatprep.subr.bf16.mxu0 0
        %772 = vmatpush1.bf16.msra.mxu0 0
        %773 = vmatprep.subr.bf16.mxu0 0
        %774 = vmatpush1.bf16.msra.mxu0 0
        %775 = vmatprep.subr.bf16.mxu0 0
        %776 = vmatpush1.bf16.msra.mxu0 0
        %777 = vmatprep.subr.bf16.mxu0 0
        %778 = vmatpush1.bf16.msra.mxu0 0
        %779 = vmatprep.subr.bf16.mxu0 0
        %780 = vmatpush1.bf16.msra.mxu0 0
        %781 = vmatprep.subr.bf16.mxu0 0
        %782 = vmatpush1.bf16.msra.mxu0 0
        %783 = vmatprep.subr.bf16.mxu0 0
        %784 = vmatpush1.bf16.msra.mxu0 0
        %785 = vmatprep.mubr.bf16.mxu0 0
        %786 = vmatmul.mubr.bf16.gmra.mrb[0].mxu0 %v747
        %v787 = vpop.f32.mrb[0].mxu0
        %v788 = vadd.f32 %v738, %v787
        %v789 = vpop.f32.mrb[0].mxu0
        %v790 = vpop.f32.mrb[0].mxu0
        %v791 = vpop.f32.mrb[0].mxu0
        %792 = vdwg.mxu0
        %793 = vst [vmem:[%s229] sm:$0xff] %v788
        %s794 = sand.u32 %s151, 1
        %s795 = scalar_lea.sflag [#allocation6], %s794
        %s796 = sand.u32 %s151, 1
        %s797 = smul.addr %s796, 8
        %s798 = scalar_lea.vmem [#allocation5], %s797
        // Predicated region
        $region45: #{tpu_custom_call.1} parent=39 // pred_check
          %p799 = pneg %p161
        $region46: #{tpu_custom_call.1} parent=39 // pred_check_branch
          %801 = sbr.rel (%p799) target = $region48
        $region47: #{tpu_custom_call.1} parent=39 // pred_region
          %s803 = ssub.s32 128, 128
          %804 = vsyncadd %s795, %s803
          %s805 = sadd.s32 %s24, %s23
          %s806 = smul.addr %s805, 128
          %s807 = scalar_lea.hbm %s5, %s806
          %s809 = sshll.u32 %s798, 4
          %s810 = int_to_ptr.vmem [resolvable:$true] %s809
          %812 = dma.vmem_to_hbm [thread:$0]  %s810, 128, %s807, %s795
        $region48: #{tpu_custom_call.1} parent=39 // pred_fallthru
          _
      $region40: #{tpu_custom_call.1} parent=5 // pred_fallthru
        _
      %p813 = scmp.le.s32.totalorder 2, %s14
      // Predicated region
      $region49: #{tpu_custom_call.1} parent=5 // pred_check
        %p814 = pneg %p813
      $region50: #{tpu_custom_call.1} parent=5 // pred_check_branch
        %816 = sbr.rel (%p814) target = $region52
      $region51: #{tpu_custom_call.1} parent=5 // pred_region
        %s817 = ssub.s32 %s14, 2
        // Predicated region
        $region53: #{tpu_custom_call.1} parent=51 // pred_check
          %p818 = pneg %p167
        $region54: #{tpu_custom_call.1} parent=51 // pred_check_branch
          %820 = sbr.rel (%p818) target = $region56
        $region55: #{tpu_custom_call.1} parent=51 // pred_region
          %s821 = sand.u32 %s152, 1
          %s822 = scalar_lea.sflag [#allocation6], %s821
          %s823 = sand.u32 %s152, 1
          %s824 = smul.addr %s823, 8
          %s825 = scalar_lea.vmem [#allocation5], %s824
          %826 = dma.done %s822, 128
        $region56: #{tpu_custom_call.1} parent=51 // pred_fallthru
          _
      $region52: #{tpu_custom_call.1} parent=5 // pred_fallthru
        _
    $region6: #{tpu_custom_call.1} parent=1 // loop_footer
      %s18 = sadd.s32 1, %s14
    $region7: #{tpu_custom_call.1} parent=1 // loop_footer_branch
      %13 = sbr.rel target = $region3
    $region8: #{tpu_custom_call.1} parent=1 // loop_exit
      _
    %827 = vsyncpa [#allocation6], 1
    %s828 = scalar_lea.sflag [#allocation6], 1
    %829 = vsyncpa %s828, 1

</llo_original>
